<compile_context>
chip_gen: v5e
topology: v5e:2x2
jax: 0.10.0
libtpu: 0.0.40
codegen_flags: <defaults>
</compile_context>

<pallas_src>
import functools

import jax
import jax.numpy as jnp
import numpy as np
from jax.experimental import pallas as pl
from jax.experimental.pallas import tpu as pltpu


def _round_up(x, m):
    return (x + m - 1) // m * m


def _mlp_decoder_kernel(z_ref, w0_ref, b0_ref, w1_ref, b1_ref, w2_ref, b2_ref,
                        gather_ref, bcast_ref, gid_ref, o_ref, *, num_aa_types):
    A = num_aa_types

    # ---- MLP: Linear -> tanh -> Linear -> tanh -> Linear -------------------
    # layer 0 (tiny: K = dim_z, kept f32)
    h = jnp.dot(z_ref[...], w0_ref[...], preferred_element_type=jnp.float32)
    h = jnp.tanh(h + b0_ref[...])
    # layer 1 (bf16 operands, f32 accumulation on the MXU)
    h = jnp.dot(h.astype(jnp.bfloat16), w1_ref[...],
                preferred_element_type=jnp.float32)
    h = jnp.tanh(h + b1_ref[...])
    # layer 2 -> logits (bf16 operands, f32 accumulation)
    logits = jnp.dot(h.astype(jnp.bfloat16), w2_ref[...],
                     preferred_element_type=jnp.float32) + b2_ref[...]

    P = logits.shape[-1]
    gid = gid_ref[...]                      # (8, P) f32 group id of each lane

    # ---- exact per-group max over groups of A consecutive lanes ------------
    # Masked segmented all-reduce: at each step combine with the lanes +/- s
    # away, accepting only values that physically arrive from the same group
    # (the group-id row is rolled with the same shift, so the mask is correct
    # whichever direction the hardware roll uses).  All of this sits on the
    # XLU / VPU slots; the MXU stays free for the real matmuls.
    gmax = logits
    reach, s = 0, 1
    while reach < A - 1:
        for sh in (s, P - s):
            rolled = pltpu.roll(gmax, shift=sh, axis=1)
            gid_r = pltpu.roll(gid, shift=sh, axis=1)
            same = (gid_r == gid)[0:1, :]              # (1, P) membership mask
            gmax = jnp.where(same, jnp.maximum(gmax, rolled), gmax)
        reach += s
        s *= 2

    # ---- segmented log-softmax ----------------------------------------------
    shifted = logits - gmax                  # <= 0 (exact per-group stabiliser)
    e = jnp.exp(shifted)
    # per-group sum(exp), gathered into the reduced (TM, S_pad) space
    gsum = jnp.dot(e, gather_ref[...], preferred_element_type=jnp.float32)
    # log on the reduced sums (A x fewer EUP logs).  Real groups contain the
    # exp(0)=1 of their own max so gsum >= 1; the clamp only protects the
    # all-zero columns of padded (non-existent) groups from log(0)*0 = NaN.
    logz = jnp.log(jnp.maximum(gsum, 1e-30))
    # broadcast the log-normaliser back to every lane of its group
    logz_b = jnp.dot(logz, bcast_ref[...], preferred_element_type=jnp.float32)
    # single full-width, lane-dense store
    o_ref[...] = (shifted - logz_b).astype(o_ref.dtype)


def mlp_decoder_forward(z, params, *, seq_len, num_aa_types, batch_tile=128):
    """z: (batch, dim_z) f32. params: W0,b0,W1,b1,W2,b2 with W as (in, out), b as (1, out)."""
    batch, dim_z = z.shape
    A = num_aa_types
    bin_rep_len = seq_len * A
    assert params["W2"].shape[1] == bin_rep_len, (
        "W2 output width must equal seq_len * num_aa_types")
    P = _round_up(bin_rep_len, 128)          # lane-dense output width
    n_groups = -(-P // A)                    # padding starts on a group boundary
    S_pad = _round_up(n_groups, 128)         # reduced (per-group) lane width

    # Parameter handling: big weights -> bf16 (MXU-native, half DMA bytes),
    # biases and the tiny first layer -> f32.
    W0 = params["W0"].astype(jnp.float32)
    b0 = params["b0"].astype(jnp.float32)
    W1 = params["W1"].astype(jnp.bfloat16)
    b1 = params["b1"].astype(jnp.float32)
    W2 = params["W2"].astype(jnp.bfloat16)
    b2 = params["b2"].astype(jnp.float32)
    if P != bin_rep_len:                     # pad output columns to a 128 multiple
        W2 = jnp.pad(W2, ((0, 0), (0, P - bin_rep_len)))
        b2 = jnp.pad(b2, ((0, 0), (0, P - bin_rep_len)))
    H0 = W0.shape[1]
    H1 = W1.shape[1]

    # Batch tiling: TM rows per grid step (multiple of 8 sublanes).  If the
    # whole batch would fit in one step, split it so v7x's two TensorCores can
    # each take a "parallel" grid step (per review; larger TM for v5e/v6e is a
    # batch_tile sweep).
    TM = min(_round_up(batch_tile, 8), _round_up(batch, 8))
    B_pad = _round_up(batch, TM)
    if B_pad // TM == 1 and TM >= 16:
        TM = TM // 2 if TM % 16 == 0 else _round_up(TM // 2, 8)
        B_pad = _round_up(batch, TM)
    zp = z.astype(jnp.float32)
    if B_pad != batch:
        zp = jnp.pad(zp, ((0, B_pad - batch), (0, 0)))

    # Constants for the segmented softmax (built once on host).
    col = np.arange(P)
    gid = col // A                                                         # (P,)
    gather = (gid[:, None] == np.arange(S_pad)[None, :]).astype(np.float32)  # (P, S_pad)
    bcast = np.ascontiguousarray(gather.T)                                  # (S_pad, P)
    gid_rows = np.tile(gid.astype(np.float32), (8, 1))                      # (8, P)

    grid = (B_pad // TM,)
    kernel = functools.partial(_mlp_decoder_kernel, num_aa_types=A)

    flops = 2 * B_pad * (dim_z * H0 + H0 * H1 + H1 * P + 2 * P * S_pad)
    transcendentals = B_pad * (H0 + H1 + P + S_pad)
    bytes_accessed = (zp.size * 4 + W0.size * 4 + W1.size * 2 + W2.size * 2
                      + (b0.size + b1.size + b2.size) * 4
                      + (gather.size + bcast.size + gid_rows.size) * 4
                      + B_pad * P * 4)

    out = pl.pallas_call(
        kernel,
        out_shape=jax.ShapeDtypeStruct((B_pad, P), jnp.float32),
        grid_spec=pltpu.PrefetchScalarGridSpec(
            num_scalar_prefetch=0,
            grid=grid,
            in_specs=[
                pl.BlockSpec((TM, dim_z), lambda i: (i, 0)),   # z tile (pipelined)
                pl.BlockSpec((dim_z, H0), lambda i: (0, 0)),   # W0  (VMEM resident)
                pl.BlockSpec((1, H0), lambda i: (0, 0)),       # b0
                pl.BlockSpec((H0, H1), lambda i: (0, 0)),      # W1
                pl.BlockSpec((1, H1), lambda i: (0, 0)),       # b1
                pl.BlockSpec((H1, P), lambda i: (0, 0)),       # W2
                pl.BlockSpec((1, P), lambda i: (0, 0)),        # b2
                pl.BlockSpec((P, S_pad), lambda i: (0, 0)),    # 0/1 group gather
                pl.BlockSpec((S_pad, P), lambda i: (0, 0)),    # 0/1 group broadcast
                pl.BlockSpec((8, P), lambda i: (0, 0)),        # group-id row
            ],
            out_specs=pl.BlockSpec((TM, P), lambda i: (i, 0)),
        ),
        compiler_params=pltpu.CompilerParams(
            dimension_semantics=("parallel",),
            # NOTE: at realistic seq_len (P >~ 8k) the (H1,P)/(P,S_pad)/(S_pad,P)
            # blocks should be N-tiled (TN a multiple of lcm(A,128)) and the
            # constant-index inputs marked pipeline_mode=pl.Buffered(1) so they
            # stay single-buffered inside v7x's 64 MiB VMEM; at these sizes
            # whole-block residency is fine.
            vmem_limit_bytes=64 * 1024 * 1024,
        ),
        cost_estimate=pl.CostEstimate(
            flops=flops, transcendentals=transcendentals,
            bytes_accessed=bytes_accessed),
    )(zp, W0, b0, W1, b1, W2, b2,
      jnp.asarray(gather), jnp.asarray(bcast), jnp.asarray(gid_rows))

    return out[:batch, :bin_rep_len]


def _init_params(key, dim_z, hidden_units, bin_rep_len):
    """Deterministic synthetic parameters (same layer shapes as the torch module)."""
    k = jax.random.split(key, 6)
    h0, h1 = hidden_units[0], hidden_units[1]
    scale = 0.1
    return {
        "W0": scale * jax.random.normal(k[0], (dim_z, h0), jnp.float32),
        "b0": scale * jax.random.normal(k[1], (1, h0), jnp.float32),
        "W1": scale * jax.random.normal(k[2], (h0, h1), jnp.float32),
        "b1": scale * jax.random.normal(k[3], (1, h1), jnp.float32),
        "W2": scale * jax.random.normal(k[4], (h1, bin_rep_len), jnp.float32),
        "b2": scale * jax.random.normal(k[5], (1, bin_rep_len), jnp.float32),
    }


def _reference_forward(z, params, seq_len, num_aa_types):
    """Pure-JAX f32 reference matching the torch forward."""
    h = jnp.tanh(z @ params["W0"] + params["b0"])
    h = jnp.tanh(h @ params["W1"] + params["b1"])
    out = h @ params["W2"] + params["b2"]
    out3 = out.reshape(-1, seq_len, num_aa_types)
    log_p = jax.nn.log_softmax(out3, axis=-1)
    return log_p.reshape(-1, seq_len * num_aa_types)


if __name__ == "__main__":
    key = jax.random.PRNGKey(0)

    # --- config 1: small shapes consistent with the module ------------------
    batch, dim_z, hidden_units = 2, 4, [32, 32]
    seq_len, num_aa_types = 8, 16
    bin_rep_len = seq_len * num_aa_types

    kz, kp, kz2 = jax.random.split(key, 3)
    z = jax.random.normal(kz, (batch, dim_z), jnp.float32)
    params = _init_params(kp, dim_z, hidden_units, bin_rep_len)

    log_p = mlp_decoder_forward(z, params, seq_len=seq_len,
                                num_aa_types=num_aa_types)
    log_p = jax.block_until_ready(log_p)
    ref = _reference_forward(z, params, seq_len, num_aa_types)
    assert log_p.shape == (batch, bin_rep_len)
    # bf16 MXU operands for the two big layers -> compare against the pure-f32
    # reference with a bf16-appropriate tolerance.
    assert jnp.allclose(log_p, ref, atol=1e-2, rtol=1e-2), (
        "mismatch vs reference (config 1): max abs diff "
        f"{float(jnp.max(jnp.abs(log_p - ref)))}")

    # --- config 2: exercises multi-step batch grid, batch padding, non-128
    #     bin_rep_len (lane padding) and a non-power-of-two group size --------
    batch2, seq_len2, num_aa_types2 = 20, 5, 20
    bin_rep_len2 = seq_len2 * num_aa_types2
    z2 = jax.random.normal(kz2, (batch2, dim_z), jnp.float32)
    params2 = _init_params(jax.random.fold_in(kp, 1), dim_z, hidden_units,
                           bin_rep_len2)
    log_p2 = mlp_decoder_forward(z2, params2, seq_len=seq_len2,
                                 num_aa_types=num_aa_types2, batch_tile=8)
    log_p2 = jax.block_until_ready(log_p2)
    ref2 = _reference_forward(z2, params2, seq_len2, num_aa_types2)
    assert log_p2.shape == (batch2, bin_rep_len2)
    assert jnp.allclose(log_p2, ref2, atol=1e-2, rtol=1e-2), (
        "mismatch vs reference (config 2): max abs diff "
        f"{float(jnp.max(jnp.abs(log_p2 - ref2)))}")

    print("KERNEL_OK")
</pallas_src>

<mosaic_0001>
module attributes {stable_mosaic.version = 11 : i64} {
  func.func @_mlp_decoder_kernel(%arg0: i32, %arg1: memref<8x4xf32, #tpu.memory_space<vmem>>, %arg2: memref<4x32xf32, #tpu.memory_space<vmem>>, %arg3: memref<1x32xf32, #tpu.memory_space<vmem>>, %arg4: memref<32x32xbf16, #tpu.memory_space<vmem>>, %arg5: memref<1x32xf32, #tpu.memory_space<vmem>>, %arg6: memref<32x128xbf16, #tpu.memory_space<vmem>>, %arg7: memref<1x128xf32, #tpu.memory_space<vmem>>, %arg8: memref<128x128xf32, #tpu.memory_space<vmem>>, %arg9: memref<128x128xf32, #tpu.memory_space<vmem>>, %arg10: memref<8x128xf32, #tpu.memory_space<vmem>>, %arg11: memref<8x128xf32, #tpu.memory_space<vmem>>) attributes {dimension_semantics = [#tpu.dimension_semantics<parallel>], iteration_bounds = array<i64: 1>, scalar_prefetch = 0 : i64, scratch_operands = 0 : i64, tpu.core_type = #tpu.core_type<tc>, window_params = [{transform_indices = @transform_0, window_bounds = array<i64: 8, 4>}, {pipeline_mode = #tpu.pipeline_mode<synchronous>, transform_indices = @transform_1, window_bounds = array<i64: 4, 32>}, {pipeline_mode = #tpu.pipeline_mode<synchronous>, transform_indices = @transform_2, window_bounds = array<i64: 1, 32>}, {pipeline_mode = #tpu.pipeline_mode<synchronous>, transform_indices = @transform_3, window_bounds = array<i64: 32, 32>}, {pipeline_mode = #tpu.pipeline_mode<synchronous>, transform_indices = @transform_4, window_bounds = array<i64: 1, 32>}, {pipeline_mode = #tpu.pipeline_mode<synchronous>, transform_indices = @transform_5, window_bounds = array<i64: 32, 128>}, {pipeline_mode = #tpu.pipeline_mode<synchronous>, transform_indices = @transform_6, window_bounds = array<i64: 1, 128>}, {pipeline_mode = #tpu.pipeline_mode<synchronous>, transform_indices = @transform_7, window_bounds = array<i64: 128, 128>}, {pipeline_mode = #tpu.pipeline_mode<synchronous>, transform_indices = @transform_8, window_bounds = array<i64: 128, 128>}, {pipeline_mode = #tpu.pipeline_mode<synchronous>, transform_indices = @transform_9, window_bounds = array<i64: 8, 128>}, {transform_indices = @transform_10, window_bounds = array<i64: 8, 128>}]} {
    %c0 = arith.constant 0 : index
    %c0_0 = arith.constant 0 : index
    %0 = vector.load %arg1[%c0, %c0_0] : memref<8x4xf32, #tpu.memory_space<vmem>>, vector<8x4xf32>
    %c0_1 = arith.constant 0 : index
    %c0_2 = arith.constant 0 : index
    %1 = vector.load %arg2[%c0_1, %c0_2] : memref<4x32xf32, #tpu.memory_space<vmem>>, vector<4x32xf32>
    %cst = arith.constant dense<0.000000e+00> : vector<8x32xf32>
    %2 = tpu.matmul %0, %1, %cst {dimension_numbers = #tpu.dot_dimension_numbers<[1], [0], [0], [1], [0, 0, 1, 1], [], []>} : vector<8x4xf32>, vector<4x32xf32>, vector<8x32xf32> -> vector<8x32xf32>
    %c0_3 = arith.constant 0 : index
    %c0_4 = arith.constant 0 : index
    %3 = vector.load %arg3[%c0_3, %c0_4] : memref<1x32xf32, #tpu.memory_space<vmem>>, vector<1x32xf32>
    %4 = vector.broadcast %3 : vector<1x32xf32> to vector<8x32xf32>
    %5 = arith.addf %2, %4 : vector<8x32xf32>
    %6 = math.tanh %5 : vector<8x32xf32>
    %7 = arith.truncf %6 : vector<8x32xf32> to vector<8x32xbf16>
    %c0_5 = arith.constant 0 : index
    %c0_6 = arith.constant 0 : index
    %8 = vector.load %arg4[%c0_5, %c0_6] : memref<32x32xbf16, #tpu.memory_space<vmem>>, vector<32x32xbf16>
    %cst_7 = arith.constant dense<0.000000e+00> : vector<8x32xf32>
    %9 = tpu.matmul %7, %8, %cst_7 {dimension_numbers = #tpu.dot_dimension_numbers<[1], [0], [0], [1], [0, 0, 1, 1], [], []>} : vector<8x32xbf16>, vector<32x32xbf16>, vector<8x32xf32> -> vector<8x32xf32>
    %c0_8 = arith.constant 0 : index
    %c0_9 = arith.constant 0 : index
    %10 = vector.load %arg5[%c0_8, %c0_9] : memref<1x32xf32, #tpu.memory_space<vmem>>, vector<1x32xf32>
    %11 = vector.broadcast %10 : vector<1x32xf32> to vector<8x32xf32>
    %12 = arith.addf %9, %11 : vector<8x32xf32>
    %13 = math.tanh %12 : vector<8x32xf32>
    %14 = arith.truncf %13 : vector<8x32xf32> to vector<8x32xbf16>
    %c0_10 = arith.constant 0 : index
    %c0_11 = arith.constant 0 : index
    %15 = vector.load %arg6[%c0_10, %c0_11] : memref<32x128xbf16, #tpu.memory_space<vmem>>, vector<32x128xbf16>
    %cst_12 = arith.constant dense<0.000000e+00> : vector<8x128xf32>
    %16 = tpu.matmul %14, %15, %cst_12 {dimension_numbers = #tpu.dot_dimension_numbers<[1], [0], [0], [1], [0, 0, 1, 1], [], []>} : vector<8x32xbf16>, vector<32x128xbf16>, vector<8x128xf32> -> vector<8x128xf32>
    %c0_13 = arith.constant 0 : index
    %c0_14 = arith.constant 0 : index
    %17 = vector.load %arg7[%c0_13, %c0_14] : memref<1x128xf32, #tpu.memory_space<vmem>>, vector<1x128xf32>
    %18 = vector.broadcast %17 : vector<1x128xf32> to vector<8x128xf32>
    %19 = arith.addf %16, %18 : vector<8x128xf32>
    %c0_15 = arith.constant 0 : index
    %c0_16 = arith.constant 0 : index
    %20 = vector.load %arg10[%c0_15, %c0_16] : memref<8x128xf32, #tpu.memory_space<vmem>>, vector<8x128xf32>
    %c1_i32 = arith.constant 1 : i32
    %21 = tpu.dynamic_rotate %19 by %c1_i32 dim 1 : vector<8x128xf32>, i32 -> vector<8x128xf32>
    %c1_i32_17 = arith.constant 1 : i32
    %22 = tpu.dynamic_rotate %20 by %c1_i32_17 dim 1 : vector<8x128xf32>, i32 -> vector<8x128xf32>
    %23 = arith.cmpf oeq, %22, %20 : vector<8x128xf32>
    %24 = vector.extract_strided_slice %23 {offsets = [0, 0], sizes = [1, 128], strides = [1, 1]} : vector<8x128xi1> to vector<1x128xi1>
    %25 = arith.maximumf %19, %21 : vector<8x128xf32>
    %26 = vector.shape_cast %24 : vector<1x128xi1> to vector<1x128xi1>
    %27 = vector.broadcast %26 : vector<1x128xi1> to vector<8x128xi1>
    %28 = arith.select %27, %25, %19 : vector<8x128xi1>, vector<8x128xf32>
    %c127_i32 = arith.constant 127 : i32
    %29 = tpu.dynamic_rotate %28 by %c127_i32 dim 1 : vector<8x128xf32>, i32 -> vector<8x128xf32>
    %c127_i32_18 = arith.constant 127 : i32
    %30 = tpu.dynamic_rotate %20 by %c127_i32_18 dim 1 : vector<8x128xf32>, i32 -> vector<8x128xf32>
    %31 = arith.cmpf oeq, %30, %20 : vector<8x128xf32>
    %32 = vector.extract_strided_slice %31 {offsets = [0, 0], sizes = [1, 128], strides = [1, 1]} : vector<8x128xi1> to vector<1x128xi1>
    %33 = arith.maximumf %28, %29 : vector<8x128xf32>
    %34 = vector.shape_cast %32 : vector<1x128xi1> to vector<1x128xi1>
    %35 = vector.broadcast %34 : vector<1x128xi1> to vector<8x128xi1>
    %36 = arith.select %35, %33, %28 : vector<8x128xi1>, vector<8x128xf32>
    %c2_i32 = arith.constant 2 : i32
    %37 = tpu.dynamic_rotate %36 by %c2_i32 dim 1 : vector<8x128xf32>, i32 -> vector<8x128xf32>
    %c2_i32_19 = arith.constant 2 : i32
    %38 = tpu.dynamic_rotate %20 by %c2_i32_19 dim 1 : vector<8x128xf32>, i32 -> vector<8x128xf32>
    %39 = arith.cmpf oeq, %38, %20 : vector<8x128xf32>
    %40 = vector.extract_strided_slice %39 {offsets = [0, 0], sizes = [1, 128], strides = [1, 1]} : vector<8x128xi1> to vector<1x128xi1>
    %41 = arith.maximumf %36, %37 : vector<8x128xf32>
    %42 = vector.shape_cast %40 : vector<1x128xi1> to vector<1x128xi1>
    %43 = vector.broadcast %42 : vector<1x128xi1> to vector<8x128xi1>
    %44 = arith.select %43, %41, %36 : vector<8x128xi1>, vector<8x128xf32>
    %c126_i32 = arith.constant 126 : i32
    %45 = tpu.dynamic_rotate %44 by %c126_i32 dim 1 : vector<8x128xf32>, i32 -> vector<8x128xf32>
    %c126_i32_20 = arith.constant 126 : i32
    %46 = tpu.dynamic_rotate %20 by %c126_i32_20 dim 1 : vector<8x128xf32>, i32 -> vector<8x128xf32>
    %47 = arith.cmpf oeq, %46, %20 : vector<8x128xf32>
    %48 = vector.extract_strided_slice %47 {offsets = [0, 0], sizes = [1, 128], strides = [1, 1]} : vector<8x128xi1> to vector<1x128xi1>
    %49 = arith.maximumf %44, %45 : vector<8x128xf32>
    %50 = vector.shape_cast %48 : vector<1x128xi1> to vector<1x128xi1>
    %51 = vector.broadcast %50 : vector<1x128xi1> to vector<8x128xi1>
    %52 = arith.select %51, %49, %44 : vector<8x128xi1>, vector<8x128xf32>
    %c4_i32 = arith.constant 4 : i32
    %53 = tpu.dynamic_rotate %52 by %c4_i32 dim 1 : vector<8x128xf32>, i32 -> vector<8x128xf32>
    %c4_i32_21 = arith.constant 4 : i32
    %54 = tpu.dynamic_rotate %20 by %c4_i32_21 dim 1 : vector<8x128xf32>, i32 -> vector<8x128xf32>
    %55 = arith.cmpf oeq, %54, %20 : vector<8x128xf32>
    %56 = vector.extract_strided_slice %55 {offsets = [0, 0], sizes = [1, 128], strides = [1, 1]} : vector<8x128xi1> to vector<1x128xi1>
    %57 = arith.maximumf %52, %53 : vector<8x128xf32>
    %58 = vector.shape_cast %56 : vector<1x128xi1> to vector<1x128xi1>
    %59 = vector.broadcast %58 : vector<1x128xi1> to vector<8x128xi1>
    %60 = arith.select %59, %57, %52 : vector<8x128xi1>, vector<8x128xf32>
    %c124_i32 = arith.constant 124 : i32
    %61 = tpu.dynamic_rotate %60 by %c124_i32 dim 1 : vector<8x128xf32>, i32 -> vector<8x128xf32>
    %c124_i32_22 = arith.constant 124 : i32
    %62 = tpu.dynamic_rotate %20 by %c124_i32_22 dim 1 : vector<8x128xf32>, i32 -> vector<8x128xf32>
    %63 = arith.cmpf oeq, %62, %20 : vector<8x128xf32>
    %64 = vector.extract_strided_slice %63 {offsets = [0, 0], sizes = [1, 128], strides = [1, 1]} : vector<8x128xi1> to vector<1x128xi1>
    %65 = arith.maximumf %60, %61 : vector<8x128xf32>
    %66 = vector.shape_cast %64 : vector<1x128xi1> to vector<1x128xi1>
    %67 = vector.broadcast %66 : vector<1x128xi1> to vector<8x128xi1>
    %68 = arith.select %67, %65, %60 : vector<8x128xi1>, vector<8x128xf32>
    %c8_i32 = arith.constant 8 : i32
    %69 = tpu.dynamic_rotate %68 by %c8_i32 dim 1 : vector<8x128xf32>, i32 -> vector<8x128xf32>
    %c8_i32_23 = arith.constant 8 : i32
    %70 = tpu.dynamic_rotate %20 by %c8_i32_23 dim 1 : vector<8x128xf32>, i32 -> vector<8x128xf32>
    %71 = arith.cmpf oeq, %70, %20 : vector<8x128xf32>
    %72 = vector.extract_strided_slice %71 {offsets = [0, 0], sizes = [1, 128], strides = [1, 1]} : vector<8x128xi1> to vector<1x128xi1>
    %73 = arith.maximumf %68, %69 : vector<8x128xf32>
    %74 = vector.shape_cast %72 : vector<1x128xi1> to vector<1x128xi1>
    %75 = vector.broadcast %74 : vector<1x128xi1> to vector<8x128xi1>
    %76 = arith.select %75, %73, %68 : vector<8x128xi1>, vector<8x128xf32>
    %c120_i32 = arith.constant 120 : i32
    %77 = tpu.dynamic_rotate %76 by %c120_i32 dim 1 : vector<8x128xf32>, i32 -> vector<8x128xf32>
    %c120_i32_24 = arith.constant 120 : i32
    %78 = tpu.dynamic_rotate %20 by %c120_i32_24 dim 1 : vector<8x128xf32>, i32 -> vector<8x128xf32>
    %79 = arith.cmpf oeq, %78, %20 : vector<8x128xf32>
    %80 = vector.extract_strided_slice %79 {offsets = [0, 0], sizes = [1, 128], strides = [1, 1]} : vector<8x128xi1> to vector<1x128xi1>
    %81 = arith.maximumf %76, %77 : vector<8x128xf32>
    %82 = vector.shape_cast %80 : vector<1x128xi1> to vector<1x128xi1>
    %83 = vector.broadcast %82 : vector<1x128xi1> to vector<8x128xi1>
    %84 = arith.select %83, %81, %76 : vector<8x128xi1>, vector<8x128xf32>
    %85 = arith.subf %19, %84 : vector<8x128xf32>
    %86 = math.exp %85 : vector<8x128xf32>
    %c0_25 = arith.constant 0 : index
    %c0_26 = arith.constant 0 : index
    %87 = vector.load %arg8[%c0_25, %c0_26] : memref<128x128xf32, #tpu.memory_space<vmem>>, vector<128x128xf32>
    %cst_27 = arith.constant dense<0.000000e+00> : vector<8x128xf32>
    %88 = tpu.matmul %86, %87, %cst_27 {dimension_numbers = #tpu.dot_dimension_numbers<[1], [0], [0], [1], [0, 0, 1, 1], [], []>} : vector<8x128xf32>, vector<128x128xf32>, vector<8x128xf32> -> vector<8x128xf32>
    %cst_28 = arith.constant 1.000000e-30 : f32
    %89 = vector.broadcast %cst_28 : f32 to vector<8x128xf32>
    %90 = arith.maximumf %88, %89 : vector<8x128xf32>
    %91 = math.log %90 : vector<8x128xf32>
    %c0_29 = arith.constant 0 : index
    %c0_30 = arith.constant 0 : index
    %92 = vector.load %arg9[%c0_29, %c0_30] : memref<128x128xf32, #tpu.memory_space<vmem>>, vector<128x128xf32>
    %cst_31 = arith.constant dense<0.000000e+00> : vector<8x128xf32>
    %93 = tpu.matmul %91, %92, %cst_31 {dimension_numbers = #tpu.dot_dimension_numbers<[1], [0], [0], [1], [0, 0, 1, 1], [], []>} : vector<8x128xf32>, vector<128x128xf32>, vector<8x128xf32> -> vector<8x128xf32>
    %94 = arith.subf %85, %93 : vector<8x128xf32>
    %c0_32 = arith.constant 0 : index
    %c0_33 = arith.constant 0 : index
    %95 = vector.load %arg11[%c0_32, %c0_33] : memref<8x128xf32, #tpu.memory_space<vmem>>, vector<8x128xf32>
    tpu.vector_store %arg11[%c0_32, %c0_33], %94 {strides = array<i32>} : memref<8x128xf32, #tpu.memory_space<vmem>>, vector<8x128xf32>,
    return
  }
  func.func @transform_0(%arg0: i32) -> (i32, i32) {
    %c0_i32 = arith.constant 0 : i32
    %c0_i32_0 = arith.constant 0 : i32
    return %arg0, %c0_i32 : i32, i32
  }
  func.func @transform_1(%arg0: i32) -> (i32, i32) {
    %c0_i32 = arith.constant 0 : i32
    %c0_i32_0 = arith.constant 0 : i32
    %c0_i32_1 = arith.constant 0 : i32
    return %c0_i32, %c0_i32_0 : i32, i32
  }
  func.func @transform_2(%arg0: i32) -> (i32, i32) {
    %c0_i32 = arith.constant 0 : i32
    %c0_i32_0 = arith.constant 0 : i32
    %c0_i32_1 = arith.constant 0 : i32
    return %c0_i32, %c0_i32_0 : i32, i32
  }
  func.func @transform_3(%arg0: i32) -> (i32, i32) {
    %c0_i32 = arith.constant 0 : i32
    %c0_i32_0 = arith.constant 0 : i32
    %c0_i32_1 = arith.constant 0 : i32
    return %c0_i32, %c0_i32_0 : i32, i32
  }
  func.func @transform_4(%arg0: i32) -> (i32, i32) {
    %c0_i32 = arith.constant 0 : i32
    %c0_i32_0 = arith.constant 0 : i32
    %c0_i32_1 = arith.constant 0 : i32
    return %c0_i32, %c0_i32_0 : i32, i32
  }
  func.func @transform_5(%arg0: i32) -> (i32, i32) {
    %c0_i32 = arith.constant 0 : i32
    %c0_i32_0 = arith.constant 0 : i32
    %c0_i32_1 = arith.constant 0 : i32
    return %c0_i32, %c0_i32_0 : i32, i32
  }
  func.func @transform_6(%arg0: i32) -> (i32, i32) {
    %c0_i32 = arith.constant 0 : i32
    %c0_i32_0 = arith.constant 0 : i32
    %c0_i32_1 = arith.constant 0 : i32
    return %c0_i32, %c0_i32_0 : i32, i32
  }
  func.func @transform_7(%arg0: i32) -> (i32, i32) {
    %c0_i32 = arith.constant 0 : i32
    %c0_i32_0 = arith.constant 0 : i32
    %c0_i32_1 = arith.constant 0 : i32
    return %c0_i32, %c0_i32_0 : i32, i32
  }
  func.func @transform_8(%arg0: i32) -> (i32, i32) {
    %c0_i32 = arith.constant 0 : i32
    %c0_i32_0 = arith.constant 0 : i32
    %c0_i32_1 = arith.constant 0 : i32
    return %c0_i32, %c0_i32_0 : i32, i32
  }
  func.func @transform_9(%arg0: i32) -> (i32, i32) {
    %c0_i32 = arith.constant 0 : i32
    %c0_i32_0 = arith.constant 0 : i32
    %c0_i32_1 = arith.constant 0 : i32
    return %c0_i32, %c0_i32_0 : i32, i32
  }
  func.func @transform_10(%arg0: i32) -> (i32, i32) {
    %c0_i32 = arith.constant 0 : i32
    %c0_i32_0 = arith.constant 0 : i32
    return %arg0, %c0_i32 : i32, i32
  }
}

</mosaic_0001>

<llo_original>
// kernel: tpu_custom_call.1
$region0: #{tpu_custom_call.1}
  #allocation0 [shape = 'u32[]', space=smem, size = 0x4, offset = 0x4, fixed_abs, tag = 'smem constant byte address 0x4 - core index']
  #allocation1 [shape = 'u32[72,128]{1,0:T(1,128)}', space=vmem, size = 0x9000, scoped, tag = 'internal scratch']
  %s0 = inlined_call_operand.vmem [shape: f32[8,4], index: 0, kind: input, shape index: {}]
  %s1 = inlined_call_operand.hbm [shape: f32[4,32], index: 1, kind: input, shape index: {}]
  %s2 = inlined_call_operand.hbm [shape: f32[1,32], index: 2, kind: input, shape index: {}]
  %s3 = inlined_call_operand.hbm [shape: bf16[32,32], index: 3, kind: input, shape index: {}]
  %s4 = inlined_call_operand.hbm [shape: f32[1,32], index: 4, kind: input, shape index: {}]
  %s5 = inlined_call_operand.vmem [shape: bf16[32,128], index: 5, kind: input, shape index: {}]
  %s6 = inlined_call_operand.vmem [shape: f32[1,128], index: 6, kind: input, shape index: {}]
  %s7 = inlined_call_operand.hbm [shape: f32[128,128], index: 7, kind: input, shape index: {}]
  %s8 = inlined_call_operand.hbm [shape: f32[128,128], index: 8, kind: input, shape index: {}]
  %s9 = inlined_call_operand.hbm [shape: f32[8,128], index: 9, kind: input, shape index: {}]
  %s10 = inlined_call_operand.hbm [shape: f32[8,128], index: 10, kind: output, shape index: {}]
  %s11 = sld [smem:[#allocation0]]
  $region78: #{tpu_custom_call.1} parent=0
    _
  %s13 = ssub.s32 1, %s11
  %s14 = scalar_select 0, %s13, %s11
  $region1: #{tpu_custom_call.1} parent=0
    #allocation2 [shape = 'u8[2048]{0}', space=vmem, size = 0x800, scoped, tag = 'input window, operand 1, single buffered']
    #allocation3 [shape = 's32[1]{0}', space=sflag, size = 0x4, scoped, tag = 'scoped memory for tpu_custom_call.1']
    #allocation4 [shape = 's32[1]{0}', space=sflag, size = 0x4, scoped, tag = 'scoped memory for tpu_custom_call.1']
    #allocation5 [shape = 'u8[512]{0}', space=vmem, size = 0x400, scoped, tag = 'input window, operand 2, single buffered']
    #allocation6 [shape = 's32[1]{0}', space=sflag, size = 0x4, scoped, tag = 'scoped memory for tpu_custom_call.1']
    #allocation7 [shape = 'u8[8192]{0}', space=vmem, size = 0x2000, scoped, tag = 'input window, operand 3, single buffered']
    #allocation8 [shape = 'u8[512]{0}', space=vmem, size = 0x400, scoped, tag = 'input window, operand 4, single buffered']
    #allocation9 [shape = 's32[1]{0}', space=sflag, size = 0x4, scoped, tag = 'scoped memory for tpu_custom_call.1']
    #allocation10 [shape = 'u8[65536]{0}', space=vmem, size = 0x10000, scoped, tag = 'input window, operand 7, single buffered']
    #allocation11 [shape = 'u8[65536]{0}', space=vmem, size = 0x10000, scoped, tag = 'input window, operand 8, single buffered']
    #allocation12 [shape = 's32[1]{0}', space=sflag, size = 0x4, scoped, tag = 'scoped memory for tpu_custom_call.1']
    #allocation13 [shape = 'u8[4096]{0}', space=vmem, size = 0x1000, scoped, tag = 'input window, operand 9, single buffered']
    #allocation14 [shape = 'u8[4096]{0}', space=vmem, size = 0x1000, scoped, tag = 'output window, operand 0, single buffered']
    %15 = vsyncpa [#allocation3], 0
    %16 = vsyncpa [#allocation6], 0
    %17 = vsyncpa [#allocation9], 0
    %18 = vsyncpa [#allocation12], 0
    %19 = vsyncpa [#allocation4], 0
    // Predicated region
    $region2: #{tpu_custom_call.1} parent=1 // pred_check
      _
    $region3: #{tpu_custom_call.1} parent=1 // pred_check_branch
      %21 = sbr.rel (0) target = $region5
    $region4: #{tpu_custom_call.1} parent=1 // pred_region
      _
    $region5: #{tpu_custom_call.1} parent=1 // pred_fallthru
      _
    // Predicated region
    $region6: #{tpu_custom_call.1} parent=1 // pred_check
      _
    $region7: #{tpu_custom_call.1} parent=1 // pred_check_branch
      %23 = sbr.rel (0) target = $region9
    $region8: #{tpu_custom_call.1} parent=1 // pred_region
      %25 = vsyncadd [#allocation3], 0
      %s27 = sshll.u32 %s1, 4
      %s28 = int_to_ptr.hbm [resolvable:$true] %s27
      %s29 = sshll.u32 [#allocation2], 4
      %s30 = int_to_ptr.vmem [resolvable:$true] %s29
      %32 = dma.hbm_to_vmem [thread:$0]  %s28, 64, %s30, [#allocation3]
    $region9: #{tpu_custom_call.1} parent=1 // pred_fallthru
      _
    // Predicated region
    $region10: #{tpu_custom_call.1} parent=1 // pred_check
      _
    $region11: #{tpu_custom_call.1} parent=1 // pred_check_branch
      %34 = sbr.rel (0) target = $region13
    $region12: #{tpu_custom_call.1} parent=1 // pred_region
      %36 = vsyncadd [#allocation6], 0
      %s38 = sshll.u32 %s2, 4
      %s39 = int_to_ptr.hbm [resolvable:$true] %s38
      %s40 = sshll.u32 [#allocation5], 4
      %s41 = int_to_ptr.vmem [resolvable:$true] %s40
      %43 = dma.hbm_to_vmem [thread:$0]  %s39, 16, %s41, [#allocation6]
    $region13: #{tpu_custom_call.1} parent=1 // pred_fallthru
      _
    // Predicated region
    $region14: #{tpu_custom_call.1} parent=1 // pred_check
      _
    $region15: #{tpu_custom_call.1} parent=1 // pred_check_branch
      %45 = sbr.rel (0) target = $region17
    $region16: #{tpu_custom_call.1} parent=1 // pred_region
      %47 = vsyncadd [#allocation6], 0
      %s48 = sshll.u32 %s3, 4
      %s49 = int_to_ptr.hbm [resolvable:$true] %s48
      %s50 = sshll.u32 [#allocation7], 4
      %s51 = int_to_ptr.vmem [resolvable:$true] %s50
      %56 = dma.hbm_to_vmem [thread:$0]  %s49, 256, %s51, [#allocation6], 64, 64, 4
    $region17: #{tpu_custom_call.1} parent=1 // pred_fallthru
      _
    // Predicated region
    $region18: #{tpu_custom_call.1} parent=1 // pred_check
      _
    $region19: #{tpu_custom_call.1} parent=1 // pred_check_branch
      %58 = sbr.rel (0) target = $region21
    $region20: #{tpu_custom_call.1} parent=1 // pred_region
      %60 = vsyncadd [#allocation9], 0
      %s62 = sshll.u32 %s4, 4
      %s63 = int_to_ptr.hbm [resolvable:$true] %s62
      %s64 = sshll.u32 [#allocation8], 4
      %s65 = int_to_ptr.vmem [resolvable:$true] %s64
      %67 = dma.hbm_to_vmem [thread:$0]  %s63, 16, %s65, [#allocation9]
    $region21: #{tpu_custom_call.1} parent=1 // pred_fallthru
      _
    // Predicated region
    $region22: #{tpu_custom_call.1} parent=1 // pred_check
      _
    $region23: #{tpu_custom_call.1} parent=1 // pred_check_branch
      %69 = sbr.rel (0) target = $region25
    $region24: #{tpu_custom_call.1} parent=1 // pred_region
      _
    $region25: #{tpu_custom_call.1} parent=1 // pred_fallthru
      _
    // Predicated region
    $region26: #{tpu_custom_call.1} parent=1 // pred_check
      _
    $region27: #{tpu_custom_call.1} parent=1 // pred_check_branch
      %71 = sbr.rel (0) target = $region29
    $region28: #{tpu_custom_call.1} parent=1 // pred_region
      _
    $region29: #{tpu_custom_call.1} parent=1 // pred_fallthru
      _
    // Predicated region
    $region30: #{tpu_custom_call.1} parent=1 // pred_check
      _
    $region31: #{tpu_custom_call.1} parent=1 // pred_check_branch
      %73 = sbr.rel (0) target = $region33
    $region32: #{tpu_custom_call.1} parent=1 // pred_region
      %75 = vsyncadd [#allocation9], 0
      %s76 = sshll.u32 %s7, 4
      %s77 = int_to_ptr.hbm [resolvable:$true] %s76
      %s78 = sshll.u32 [#allocation10], 4
      %s79 = int_to_ptr.vmem [resolvable:$true] %s78
      %84 = dma.hbm_to_vmem [thread:$0]  %s77, 2048, %s79, [#allocation9], 128, 128, 8
    $region33: #{tpu_custom_call.1} parent=1 // pred_fallthru
      _
    // Predicated region
    $region34: #{tpu_custom_call.1} parent=1 // pred_check
      _
    $region35: #{tpu_custom_call.1} parent=1 // pred_check_branch
      %86 = sbr.rel (0) target = $region37
    $region36: #{tpu_custom_call.1} parent=1 // pred_region
      %88 = vsyncadd [#allocation12], 0
      %s89 = sshll.u32 %s8, 4
      %s90 = int_to_ptr.hbm [resolvable:$true] %s89
      %s91 = sshll.u32 [#allocation11], 4
      %s92 = int_to_ptr.vmem [resolvable:$true] %s91
      %97 = dma.hbm_to_vmem [thread:$0]  %s90, 2048, %s92, [#allocation12], 128, 128, 8
    $region37: #{tpu_custom_call.1} parent=1 // pred_fallthru
      _
    // Predicated region
    $region38: #{tpu_custom_call.1} parent=1 // pred_check
      _
    $region39: #{tpu_custom_call.1} parent=1 // pred_check_branch
      %99 = sbr.rel (0) target = $region41
    $region40: #{tpu_custom_call.1} parent=1 // pred_region
      %101 = vsyncadd [#allocation12], 0
      %s103 = sshll.u32 %s9, 4
      %s104 = int_to_ptr.hbm [resolvable:$true] %s103
      %s105 = sshll.u32 [#allocation13], 4
      %s106 = int_to_ptr.vmem [resolvable:$true] %s105
      %108 = dma.hbm_to_vmem [thread:$0]  %s104, 128, %s106, [#allocation12]
    $region41: #{tpu_custom_call.1} parent=1 // pred_fallthru
      _
    // Predicated region
    $region42: #{tpu_custom_call.1} parent=1 // pred_check
      _
    $region43: #{tpu_custom_call.1} parent=1 // pred_check_branch
      %110 = sbr.rel (0) target = $region45
    $region44: #{tpu_custom_call.1} parent=1 // pred_region
      %112 = dma.done [#allocation3], 64
    $region45: #{tpu_custom_call.1} parent=1 // pred_fallthru
      _
    // Predicated region
    $region46: #{tpu_custom_call.1} parent=1 // pred_check
      _
    $region47: #{tpu_custom_call.1} parent=1 // pred_check_branch
      %114 = sbr.rel (0) target = $region49
    $region48: #{tpu_custom_call.1} parent=1 // pred_region
      %116 = dma.done [#allocation6], 16
    $region49: #{tpu_custom_call.1} parent=1 // pred_fallthru
      _
    // Predicated region
    $region50: #{tpu_custom_call.1} parent=1 // pred_check
      _
    $region51: #{tpu_custom_call.1} parent=1 // pred_check_branch
      %118 = sbr.rel (0) target = $region53
    $region52: #{tpu_custom_call.1} parent=1 // pred_region
      %120 = dma.done [#allocation6], 256
    $region53: #{tpu_custom_call.1} parent=1 // pred_fallthru
      _
    // Predicated region
    $region54: #{tpu_custom_call.1} parent=1 // pred_check
      _
    $region55: #{tpu_custom_call.1} parent=1 // pred_check_branch
      %122 = sbr.rel (0) target = $region57
    $region56: #{tpu_custom_call.1} parent=1 // pred_region
      %124 = dma.done [#allocation9], 16
    $region57: #{tpu_custom_call.1} parent=1 // pred_fallthru
      _
    // Predicated region
    $region58: #{tpu_custom_call.1} parent=1 // pred_check
      _
    $region59: #{tpu_custom_call.1} parent=1 // pred_check_branch
      %126 = sbr.rel (0) target = $region61
    $region60: #{tpu_custom_call.1} parent=1 // pred_region
      %128 = dma.done [#allocation9], 2048
    $region61: #{tpu_custom_call.1} parent=1 // pred_fallthru
      _
    // Predicated region
    $region62: #{tpu_custom_call.1} parent=1 // pred_check
      _
    $region63: #{tpu_custom_call.1} parent=1 // pred_check_branch
      %130 = sbr.rel (0) target = $region65
    $region64: #{tpu_custom_call.1} parent=1 // pred_region
      %132 = dma.done [#allocation12], 2048
    $region65: #{tpu_custom_call.1} parent=1 // pred_fallthru
      _
    // Predicated region
    $region66: #{tpu_custom_call.1} parent=1 // pred_check
      _
    $region67: #{tpu_custom_call.1} parent=1 // pred_check_branch
      %134 = sbr.rel (0) target = $region69
    $region68: #{tpu_custom_call.1} parent=1 // pred_region
      %136 = dma.done [#allocation12], 128
    $region69: #{tpu_custom_call.1} parent=1 // pred_fallthru
      _
    %v138 = vld [vmem:[%s0] sm:$0xff]
    %v139 = vld [vmem:[#allocation2] sm:$0xf]
    %v140 = vld [vmem:[#allocation5] sm:$0x1]
    %v142 = vperm.slane %v140, 0
    %vm144 = vcmask 31744
    %v146 = vsel %vm144, %v138, 0
    %vm148 = vcmask 1043456
    %v150 = vsel %vm148, %v139, 0
    %152 = vmatpush.msra.mxu0 0.0
    %153 = vmatpush.msra.mxu0 0.0
    %154 = vmatpush.msra.mxu0 0.0
    %155 = vmatpush.msra.mxu0 0.0
    %156 = vmatpush.msra.mxu0 0.0
    %157 = vmatpush.msra.mxu0 0.0
    %158 = vmatpush.msra.mxu0 0.0
    %159 = vmatpush.msra.mxu0 0.0
    %160 = vmatpush.msra.mxu0 0.0
    %161 = vmatpush.msra.mxu0 0.0
    %162 = vmatpush.msra.mxu0 0.0
    %163 = vmatpush.msra.mxu0 0.0
    %164 = vmatpush.msra.mxu0 0.0
    %165 = vmatpush.msra.mxu0 0.0
    %166 = vmatpush.msra.mxu0 0.0
    %167 = vmatpush.msra.mxu0 %v150
    %168 = vmatmul.f32.gmra.mxu0 %v146
    %v169 = vpop.f32.mrf.mxu0
    %v170 = vadd.f32 %v142, %v169
    %171 = vdwg.mxu0
    %v172 = vtanh.pop %v170
    %v173 = vpack.c.bf16 %v172, %v172
    %v174 = vld [vmem:[#allocation7] sm:$0xf]
    %v175 = vld [vmem:[#allocation7 + $0x4] sm:$0xf]
    %v176 = vld [vmem:[#allocation7 + $0x8] sm:$0xf]
    %v177 = vld [vmem:[#allocation7 + $0xc] sm:$0xf]
    %v178 = vld [vmem:[#allocation8] sm:$0x1]
    %v180 = vperm.slane %v178, 0
    %v186 = vunpack.c.l.b16 %v174
    %v187 = vunpack.c.l.b16 %v175
    %v188 = vunpack.c.l.b16 %v176
    %v189 = vunpack.c.l.b16 %v177
    %v190 = vpack.c.b16 %v187, %v186
    %v191 = vpack.c.b16 %v189, %v188
    %vm194 = vcmask 261120
    %v196 = vsel %vm194, %v173, 0
    %198 = vmatpush.bf16.msra.mxu0 0
    %199 = vmatpush.bf16.msra.mxu0 0
    %200 = vmatpush.bf16.msra.mxu0 0
    %201 = vmatpush.bf16.msra.mxu0 0
    %202 = vmatpush.bf16.msra.mxu0 0
    %203 = vmatpush.bf16.msra.mxu0 0
    %204 = vmatpush.bf16.msra.mxu0 %v191
    %205 = vmatpush.bf16.msra.mxu0 %v190
    %206 = vmatmul.bf16.gmra.mxu0 %v196
    %v207 = vpop.f32.mrf.mxu0
    %v208 = vadd.f32 %v180, %v207
    %v209 = vpop.f32.mrf.mxu0
    %210 = vdwg.mxu0
    %v211 = vtanh.pop %v208
    %v212 = vpack.c.bf16 %v211, %v211
    %v213 = vld [vmem:[%s5] sm:$0xf]
    %v214 = vld [vmem:[%s5 + $0x4] sm:$0xf]
    %v215 = vld [vmem:[%s5 + $0x8] sm:$0xf]
    %v216 = vld [vmem:[%s5 + $0xc] sm:$0xf]
    %v217 = vld [vmem:[%s6] sm:$0x1]
    %v219 = vperm.slane %v217, 0
    %v225 = vunpack.c.l.b16 %v213
    %v226 = vunpack.c.l.b16 %v214
    %v227 = vunpack.c.l.b16 %v215
    %v228 = vunpack.c.l.b16 %v216
    %v229 = vpack.c.b16 %v226, %v225
    %v230 = vpack.c.b16 %v228, %v227
    %v234 = vsel %vm194, %v212, 0
    %236 = vmatpush.bf16.msra.mxu0 0
    %237 = vmatpush.bf16.msra.mxu0 0
    %238 = vmatpush.bf16.msra.mxu0 0
    %239 = vmatpush.bf16.msra.mxu0 0
    %240 = vmatpush.bf16.msra.mxu0 0
    %241 = vmatpush.bf16.msra.mxu0 0
    %242 = vmatpush.bf16.msra.mxu0 %v230
    %243 = vmatpush.bf16.msra.mxu0 %v229
    %244 = vmatmul.bf16.gmra.mxu0 %v234
    %v245 = vpop.f32.mrf.mxu0
    %v246 = vadd.f32 %v219, %v245
    %v247 = vpop.f32.mrf.mxu0
    %248 = vdwg.mxu0
    %v249 = vld [vmem:[#allocation13] sm:$0xff]
    %250 = vrot.lane.b32.xlu0 %v246, 1
    %v251 = vpop.permute.xlu0 %250
    %252 = vrot.lane.b32.xlu0 %v249, 1
    %v253 = vpop.permute.xlu0 %252
    %vm254 = vcmp.eq.f32.partialorder %v253, %v249
    %v255 = vmax.f32 %v246, %v251
    %v256 = vsel %vm254, 1, 0
    %vm257 = vcmp.eq.s32.totalorder %v256, 1
    %v259 = vrot.slane %v255, 1
    %v260 = vrot.slane %v255, 2
    %v261 = vrot.slane %v255, 3
    %v262 = vrot.slane %v255, 4
    %v263 = vrot.slane %v255, 5
    %v264 = vrot.slane %v255, 6
    %v265 = vrot.slane %v255, 7
    %v275 = vrot.slane %v246, 1
    %v276 = vrot.slane %v246, 2
    %v277 = vrot.slane %v246, 3
    %v278 = vrot.slane %v246, 4
    %v279 = vrot.slane %v246, 5
    %v280 = vrot.slane %v246, 6
    %v281 = vrot.slane %v246, 7
    %v290 = vsel %vm257, %v255, %v246
    %v291 = vsel %vm257, %v259, %v275
    %v292 = vsel %vm257, %v260, %v276
    %v293 = vsel %vm257, %v261, %v277
    %v294 = vsel %vm257, %v262, %v278
    %v295 = vsel %vm257, %v263, %v279
    %v296 = vsel %vm257, %v264, %v280
    %v297 = vsel %vm257, %v265, %v281
    %v306 = vrot.slane %v291, 7
    %vm307 = vcmask 1041409
    %v308 = vsel %vm307, %v306, %v290
    %v309 = vrot.slane %v292, 6
    %vm310 = vcmask 1042434
    %v311 = vsel %vm310, %v309, %v308
    %v312 = vrot.slane %v293, 5
    %vm313 = vcmask 1043459
    %v314 = vsel %vm313, %v312, %v311
    %v315 = vrot.slane %v294, 4
    %vm316 = vcmask 1044484
    %v317 = vsel %vm316, %v315, %v314
    %v318 = vrot.slane %v295, 3
    %vm319 = vcmask 1045509
    %v320 = vsel %vm319, %v318, %v317
    %v321 = vrot.slane %v296, 2
    %vm322 = vcmask 1046534
    %v323 = vsel %vm322, %v321, %v320
    %v324 = vrot.slane %v297, 1
    %vm325 = vcmask 1047559
    %v326 = vsel %vm325, %v324, %v323
    %328 = vrot.lane.b32.xlu0 %v326, 127
    %v329 = vpop.permute.xlu0 %328
    %330 = vrot.lane.b32.xlu0 %v249, 127
    %v331 = vpop.permute.xlu0 %330
    %vm332 = vcmp.eq.f32.partialorder %v331, %v249
    %v334 = vrot.slane %v329, 1
    %v335 = vrot.slane %v329, 2
    %v336 = vrot.slane %v329, 3
    %v337 = vrot.slane %v329, 4
    %v338 = vrot.slane %v329, 5
    %v339 = vrot.slane %v329, 6
    %v340 = vrot.slane %v329, 7
    %v349 = vmax.f32 %v290, %v329
    %v350 = vmax.f32 %v291, %v334
    %v351 = vmax.f32 %v292, %v335
    %v352 = vmax.f32 %v293, %v336
    %v353 = vmax.f32 %v294, %v337
    %v354 = vmax.f32 %v295, %v338
    %v355 = vmax.f32 %v296, %v339
    %v356 = vmax.f32 %v297, %v340
    %v357 = vsel %vm332, 1, 0
    %vm358 = vcmp.eq.s32.totalorder %v357, 1
    %v359 = vsel %vm358, %v349, %v290
    %v360 = vsel %vm358, %v350, %v291
    %v361 = vsel %vm358, %v351, %v292
    %v362 = vsel %vm358, %v352, %v293
    %v363 = vsel %vm358, %v353, %v294
    %v364 = vsel %vm358, %v354, %v295
    %v365 = vsel %vm358, %v355, %v296
    %v366 = vsel %vm358, %v356, %v297
    %v375 = vrot.slane %v360, 7
    %v376 = vsel %vm307, %v375, %v359
    %v377 = vrot.slane %v361, 6
    %v378 = vsel %vm310, %v377, %v376
    %v379 = vrot.slane %v362, 5
    %v380 = vsel %vm313, %v379, %v378
    %v381 = vrot.slane %v363, 4
    %v382 = vsel %vm316, %v381, %v380
    %v383 = vrot.slane %v364, 3
    %v384 = vsel %vm319, %v383, %v382
    %v385 = vrot.slane %v365, 2
    %v386 = vsel %vm322, %v385, %v384
    %v387 = vrot.slane %v366, 1
    %v388 = vsel %vm325, %v387, %v386
    %390 = vrot.lane.b32.xlu0 %v388, 2
    %v391 = vpop.permute.xlu0 %390
    %392 = vrot.lane.b32.xlu0 %v249, 2
    %v393 = vpop.permute.xlu0 %392
    %vm394 = vcmp.eq.f32.partialorder %v393, %v249
    %v396 = vrot.slane %v391, 1
    %v397 = vrot.slane %v391, 2
    %v398 = vrot.slane %v391, 3
    %v399 = vrot.slane %v391, 4
    %v400 = vrot.slane %v391, 5
    %v401 = vrot.slane %v391, 6
    %v402 = vrot.slane %v391, 7
    %v411 = vmax.f32 %v359, %v391
    %v412 = vmax.f32 %v360, %v396
    %v413 = vmax.f32 %v361, %v397
    %v414 = vmax.f32 %v362, %v398
    %v415 = vmax.f32 %v363, %v399
    %v416 = vmax.f32 %v364, %v400
    %v417 = vmax.f32 %v365, %v401
    %v418 = vmax.f32 %v366, %v402
    %v419 = vsel %vm394, 1, 0
    %vm420 = vcmp.eq.s32.totalorder %v419, 1
    %v421 = vsel %vm420, %v411, %v359
    %v422 = vsel %vm420, %v412, %v360
    %v423 = vsel %vm420, %v413, %v361
    %v424 = vsel %vm420, %v414, %v362
    %v425 = vsel %vm420, %v415, %v363
    %v426 = vsel %vm420, %v416, %v364
    %v427 = vsel %vm420, %v417, %v365
    %v428 = vsel %vm420, %v418, %v366
    %v437 = vrot.slane %v422, 7
    %v438 = vsel %vm307, %v437, %v421
    %v439 = vrot.slane %v423, 6
    %v440 = vsel %vm310, %v439, %v438
    %v441 = vrot.slane %v424, 5
    %v442 = vsel %vm313, %v441, %v440
    %v443 = vrot.slane %v425, 4
    %v444 = vsel %vm316, %v443, %v442
    %v445 = vrot.slane %v426, 3
    %v446 = vsel %vm319, %v445, %v444
    %v447 = vrot.slane %v427, 2
    %v448 = vsel %vm322, %v447, %v446
    %v449 = vrot.slane %v428, 1
    %v450 = vsel %vm325, %v449, %v448
    %452 = vrot.lane.b32.xlu0 %v450, 126
    %v453 = vpop.permute.xlu0 %452
    %454 = vrot.lane.b32.xlu0 %v249, 126
    %v455 = vpop.permute.xlu0 %454
    %vm456 = vcmp.eq.f32.partialorder %v455, %v249
    %v458 = vrot.slane %v453, 1
    %v459 = vrot.slane %v453, 2
    %v460 = vrot.slane %v453, 3
    %v461 = vrot.slane %v453, 4
    %v462 = vrot.slane %v453, 5
    %v463 = vrot.slane %v453, 6
    %v464 = vrot.slane %v453, 7
    %v473 = vmax.f32 %v421, %v453
    %v474 = vmax.f32 %v422, %v458
    %v475 = vmax.f32 %v423, %v459
    %v476 = vmax.f32 %v424, %v460
    %v477 = vmax.f32 %v425, %v461
    %v478 = vmax.f32 %v426, %v462
    %v479 = vmax.f32 %v427, %v463
    %v480 = vmax.f32 %v428, %v464
    %v481 = vsel %vm456, 1, 0
    %vm482 = vcmp.eq.s32.totalorder %v481, 1
    %v483 = vsel %vm482, %v473, %v421
    %v484 = vsel %vm482, %v474, %v422
    %v485 = vsel %vm482, %v475, %v423
    %v486 = vsel %vm482, %v476, %v424
    %v487 = vsel %vm482, %v477, %v425
    %v488 = vsel %vm482, %v478, %v426
    %v489 = vsel %vm482, %v479, %v427
    %v490 = vsel %vm482, %v480, %v428
    %v499 = vrot.slane %v484, 7
    %v500 = vsel %vm307, %v499, %v483
    %v501 = vrot.slane %v485, 6
    %v502 = vsel %vm310, %v501, %v500
    %v503 = vrot.slane %v486, 5
    %v504 = vsel %vm313, %v503, %v502
    %v505 = vrot.slane %v487, 4
    %v506 = vsel %vm316, %v505, %v504
    %v507 = vrot.slane %v488, 3
    %v508 = vsel %vm319, %v507, %v506
    %v509 = vrot.slane %v489, 2
    %v510 = vsel %vm322, %v509, %v508
    %v511 = vrot.slane %v490, 1
    %v512 = vsel %vm325, %v511, %v510
    %514 = vrot.lane.b32.xlu0 %v512, 4
    %v515 = vpop.permute.xlu0 %514
    %516 = vrot.lane.b32.xlu0 %v249, 4
    %v517 = vpop.permute.xlu0 %516
    %vm518 = vcmp.eq.f32.partialorder %v517, %v249
    %v520 = vrot.slane %v515, 1
    %v521 = vrot.slane %v515, 2
    %v522 = vrot.slane %v515, 3
    %v523 = vrot.slane %v515, 4
    %v524 = vrot.slane %v515, 5
    %v525 = vrot.slane %v515, 6
    %v526 = vrot.slane %v515, 7
    %v535 = vmax.f32 %v483, %v515
    %v536 = vmax.f32 %v484, %v520
    %v537 = vmax.f32 %v485, %v521
    %v538 = vmax.f32 %v486, %v522
    %v539 = vmax.f32 %v487, %v523
    %v540 = vmax.f32 %v488, %v524
    %v541 = vmax.f32 %v489, %v525
    %v542 = vmax.f32 %v490, %v526
    %v543 = vsel %vm518, 1, 0
    %vm544 = vcmp.eq.s32.totalorder %v543, 1
    %v545 = vsel %vm544, %v535, %v483
    %v546 = vsel %vm544, %v536, %v484
    %v547 = vsel %vm544, %v537, %v485
    %v548 = vsel %vm544, %v538, %v486
    %v549 = vsel %vm544, %v539, %v487
    %v550 = vsel %vm544, %v540, %v488
    %v551 = vsel %vm544, %v541, %v489
    %v552 = vsel %vm544, %v542, %v490
    %v561 = vrot.slane %v546, 7
    %v562 = vsel %vm307, %v561, %v545
    %v563 = vrot.slane %v547, 6
    %v564 = vsel %vm310, %v563, %v562
    %v565 = vrot.slane %v548, 5
    %v566 = vsel %vm313, %v565, %v564
    %v567 = vrot.slane %v549, 4
    %v568 = vsel %vm316, %v567, %v566
    %v569 = vrot.slane %v550, 3
    %v570 = vsel %vm319, %v569, %v568
    %v571 = vrot.slane %v551, 2
    %v572 = vsel %vm322, %v571, %v570
    %v573 = vrot.slane %v552, 1
    %v574 = vsel %vm325, %v573, %v572
    %576 = vrot.lane.b32.xlu0 %v574, 124
    %v577 = vpop.permute.xlu0 %576
    %578 = vrot.lane.b32.xlu0 %v249, 124
    %v579 = vpop.permute.xlu0 %578
    %vm580 = vcmp.eq.f32.partialorder %v579, %v249
    %v582 = vrot.slane %v577, 1
    %v583 = vrot.slane %v577, 2
    %v584 = vrot.slane %v577, 3
    %v585 = vrot.slane %v577, 4
    %v586 = vrot.slane %v577, 5
    %v587 = vrot.slane %v577, 6
    %v588 = vrot.slane %v577, 7
    %v597 = vmax.f32 %v545, %v577
    %v598 = vmax.f32 %v546, %v582
    %v599 = vmax.f32 %v547, %v583
    %v600 = vmax.f32 %v548, %v584
    %v601 = vmax.f32 %v549, %v585
    %v602 = vmax.f32 %v550, %v586
    %v603 = vmax.f32 %v551, %v587
    %v604 = vmax.f32 %v552, %v588
    %v605 = vsel %vm580, 1, 0
    %vm606 = vcmp.eq.s32.totalorder %v605, 1
    %v607 = vsel %vm606, %v597, %v545
    %v608 = vsel %vm606, %v598, %v546
    %v609 = vsel %vm606, %v599, %v547
    %v610 = vsel %vm606, %v600, %v548
    %v611 = vsel %vm606, %v601, %v549
    %v612 = vsel %vm606, %v602, %v550
    %v613 = vsel %vm606, %v603, %v551
    %v614 = vsel %vm606, %v604, %v552
    %v623 = vrot.slane %v608, 7
    %v624 = vsel %vm307, %v623, %v607
    %v625 = vrot.slane %v609, 6
    %v626 = vsel %vm310, %v625, %v624
    %v627 = vrot.slane %v610, 5
    %v628 = vsel %vm313, %v627, %v626
    %v629 = vrot.slane %v611, 4
    %v630 = vsel %vm316, %v629, %v628
    %v631 = vrot.slane %v612, 3
    %v632 = vsel %vm319, %v631, %v630
    %v633 = vrot.slane %v613, 2
    %v634 = vsel %vm322, %v633, %v632
    %v635 = vrot.slane %v614, 1
    %v636 = vsel %vm325, %v635, %v634
    %638 = vrot.lane.b32.xlu0 %v636, 8
    %v639 = vpop.permute.xlu0 %638
    %640 = vrot.lane.b32.xlu0 %v249, 8
    %v641 = vpop.permute.xlu0 %640
    %vm642 = vcmp.eq.f32.partialorder %v641, %v249
    %v644 = vrot.slane %v639, 1
    %v645 = vrot.slane %v639, 2
    %v646 = vrot.slane %v639, 3
    %v647 = vrot.slane %v639, 4
    %v648 = vrot.slane %v639, 5
    %v649 = vrot.slane %v639, 6
    %v650 = vrot.slane %v639, 7
    %v659 = vmax.f32 %v607, %v639
    %v660 = vmax.f32 %v608, %v644
    %v661 = vmax.f32 %v609, %v645
    %v662 = vmax.f32 %v610, %v646
    %v663 = vmax.f32 %v611, %v647
    %v664 = vmax.f32 %v612, %v648
    %v665 = vmax.f32 %v613, %v649
    %v666 = vmax.f32 %v614, %v650
    %v667 = vsel %vm642, 1, 0
    %vm668 = vcmp.eq.s32.totalorder %v667, 1
    %v669 = vsel %vm668, %v659, %v607
    %v670 = vsel %vm668, %v660, %v608
    %v671 = vsel %vm668, %v661, %v609
    %v672 = vsel %vm668, %v662, %v610
    %v673 = vsel %vm668, %v663, %v611
    %v674 = vsel %vm668, %v664, %v612
    %v675 = vsel %vm668, %v665, %v613
    %v676 = vsel %vm668, %v666, %v614
    %v685 = vrot.slane %v670, 7
    %v686 = vsel %vm307, %v685, %v669
    %v687 = vrot.slane %v671, 6
    %v688 = vsel %vm310, %v687, %v686
    %v689 = vrot.slane %v672, 5
    %v690 = vsel %vm313, %v689, %v688
    %v691 = vrot.slane %v673, 4
    %v692 = vsel %vm316, %v691, %v690
    %v693 = vrot.slane %v674, 3
    %v694 = vsel %vm319, %v693, %v692
    %v695 = vrot.slane %v675, 2
    %v696 = vsel %vm322, %v695, %v694
    %v697 = vrot.slane %v676, 1
    %v698 = vsel %vm325, %v697, %v696
    %700 = vrot.lane.b32.xlu0 %v698, 120
    %v701 = vpop.permute.xlu0 %700
    %702 = vrot.lane.b32.xlu0 %v249, 120
    %v703 = vpop.permute.xlu0 %702
    %vm704 = vcmp.eq.f32.partialorder %v703, %v249
    %v706 = vrot.slane %v701, 1
    %v707 = vrot.slane %v701, 2
    %v708 = vrot.slane %v701, 3
    %v709 = vrot.slane %v701, 4
    %v710 = vrot.slane %v701, 5
    %v711 = vrot.slane %v701, 6
    %v712 = vrot.slane %v701, 7
    %v721 = vmax.f32 %v669, %v701
    %v722 = vmax.f32 %v670, %v706
    %v723 = vmax.f32 %v671, %v707
    %v724 = vmax.f32 %v672, %v708
    %v725 = vmax.f32 %v673, %v709
    %v726 = vmax.f32 %v674, %v710
    %v727 = vmax.f32 %v675, %v711
    %v728 = vmax.f32 %v676, %v712
    %v729 = vsel %vm704, 1, 0
    %vm730 = vcmp.eq.s32.totalorder %v729, 1
    %v731 = vsel %vm730, %v721, %v669
    %v732 = vsel %vm730, %v722, %v670
    %v733 = vsel %vm730, %v723, %v671
    %v734 = vsel %vm730, %v724, %v672
    %v735 = vsel %vm730, %v725, %v673
    %v736 = vsel %vm730, %v726, %v674
    %v737 = vsel %vm730, %v727, %v675
    %v738 = vsel %vm730, %v728, %v676
    %v747 = vrot.slane %v732, 7
    %v748 = vsel %vm307, %v747, %v731
    %v749 = vrot.slane %v733, 6
    %v750 = vsel %vm310, %v749, %v748
    %v751 = vrot.slane %v734, 5
    %v752 = vsel %vm313, %v751, %v750
    %v753 = vrot.slane %v735, 4
    %v754 = vsel %vm316, %v753, %v752
    %v755 = vrot.slane %v736, 3
    %v756 = vsel %vm319, %v755, %v754
    %v757 = vrot.slane %v737, 2
    %v758 = vsel %vm322, %v757, %v756
    %v759 = vrot.slane %v738, 1
    %v760 = vsel %vm325, %v759, %v758
    %v762 = vsub.f32 %v246, %v760
    %v763 = vmul.f32 %v762, 1.442695
    %v764 = vpow.pop %v763
    %v765 = vld [vmem:[#allocation10] sm:$0xff]
    %v766 = vld [vmem:[#allocation10 + $0x8] sm:$0xff]
    %v767 = vld [vmem:[#allocation10 + $0x10] sm:$0xff]
    %v768 = vld [vmem:[#allocation10 + $0x18] sm:$0xff]
    %v769 = vld [vmem:[#allocation10 + $0x20] sm:$0xff]
    %v770 = vld [vmem:[#allocation10 + $0x28] sm:$0xff]
    %v771 = vld [vmem:[#allocation10 + $0x30] sm:$0xff]
    %v772 = vld [vmem:[#allocation10 + $0x38] sm:$0xff]
    %v773 = vld [vmem:[#allocation10 + $0x40] sm:$0xff]
    %v774 = vld [vmem:[#allocation10 + $0x48] sm:$0xff]
    %v775 = vld [vmem:[#allocation10 + $0x50] sm:$0xff]
    %v776 = vld [vmem:[#allocation10 + $0x58] sm:$0xff]
    %v777 = vld [vmem:[#allocation10 + $0x60] sm:$0xff]
    %v778 = vld [vmem:[#allocation10 + $0x68] sm:$0xff]
    %v779 = vld [vmem:[#allocation10 + $0x70] sm:$0xff]
    %v780 = vld [vmem:[#allocation10 + $0x78] sm:$0xff]
    %781 = vmatpush.msra.mxu0 %v780
    %782 = vmatpush.msra.mxu0 %v779
    %783 = vmatpush.msra.mxu0 %v778
    %784 = vmatpush.msra.mxu0 %v777
    %785 = vmatpush.msra.mxu0 %v776
    %786 = vmatpush.msra.mxu0 %v775
    %787 = vmatpush.msra.mxu0 %v774
    %788 = vmatpush.msra.mxu0 %v773
    %789 = vmatpush.msra.mxu0 %v772
    %790 = vmatpush.msra.mxu0 %v771
    %791 = vmatpush.msra.mxu0 %v770
    %792 = vmatpush.msra.mxu0 %v769
    %793 = vmatpush.msra.mxu0 %v768
    %794 = vmatpush.msra.mxu0 %v767
    %795 = vmatpush.msra.mxu0 %v766
    %796 = vmatpush.msra.mxu0 %v765
    %797 = vmatmul.f32.gmra.mxu0 %v764
    %v798 = vpop.f32.mrf.mxu0
    %v799 = vadd.f32 0.0, %v798
    %800 = vdwg.mxu0
    %v801 = vmax.f32 %v799, 1e-30
    %v802 = vlog2.pop %v801
    %v803 = vmul.f32 %v802, 0.6931472
    %v804 = vld [vmem:[#allocation11] sm:$0xff]
    %v805 = vld [vmem:[#allocation11 + $0x8] sm:$0xff]
    %v806 = vld [vmem:[#allocation11 + $0x10] sm:$0xff]
    %v807 = vld [vmem:[#allocation11 + $0x18] sm:$0xff]
    %v808 = vld [vmem:[#allocation11 + $0x20] sm:$0xff]
    %v809 = vld [vmem:[#allocation11 + $0x28] sm:$0xff]
    %v810 = vld [vmem:[#allocation11 + $0x30] sm:$0xff]
    %v811 = vld [vmem:[#allocation11 + $0x38] sm:$0xff]
    %v812 = vld [vmem:[#allocation11 + $0x40] sm:$0xff]
    %v813 = vld [vmem:[#allocation11 + $0x48] sm:$0xff]
    %v814 = vld [vmem:[#allocation11 + $0x50] sm:$0xff]
    %v815 = vld [vmem:[#allocation11 + $0x58] sm:$0xff]
    %v816 = vld [vmem:[#allocation11 + $0x60] sm:$0xff]
    %v817 = vld [vmem:[#allocation11 + $0x68] sm:$0xff]
    %v818 = vld [vmem:[#allocation11 + $0x70] sm:$0xff]
    %v819 = vld [vmem:[#allocation11 + $0x78] sm:$0xff]
    %820 = vmatpush.msra.mxu0 %v819
    %821 = vmatpush.msra.mxu0 %v818
    %822 = vmatpush.msra.mxu0 %v817
    %823 = vmatpush.msra.mxu0 %v816
    %824 = vmatpush.msra.mxu0 %v815
    %825 = vmatpush.msra.mxu0 %v814
    %826 = vmatpush.msra.mxu0 %v813
    %827 = vmatpush.msra.mxu0 %v812
    %828 = vmatpush.msra.mxu0 %v811
    %829 = vmatpush.msra.mxu0 %v810
    %830 = vmatpush.msra.mxu0 %v809
    %831 = vmatpush.msra.mxu0 %v808
    %832 = vmatpush.msra.mxu0 %v807
    %833 = vmatpush.msra.mxu0 %v806
    %834 = vmatpush.msra.mxu0 %v805
    %835 = vmatpush.msra.mxu0 %v804
    %836 = vmatmul.f32.gmra.mxu0 %v803
    %v837 = vpop.f32.mrf.mxu0
    %v838 = vadd.f32 0.0, %v837
    %839 = vdwg.mxu0
    %v840 = vsub.f32 %v762, %v838
    %841 = vst [vmem:[#allocation14] sm:$0xff] %v840
    // Predicated region
    $region70: #{tpu_custom_call.1} parent=1 // pred_check
      _
    $region71: #{tpu_custom_call.1} parent=1 // pred_check_branch
      %843 = sbr.rel (0) target = $region73
    $region72: #{tpu_custom_call.1} parent=1 // pred_region
      %845 = vsyncadd [#allocation4], 0
      %s847 = sshll.u32 [#allocation14], 4
      %s848 = int_to_ptr.vmem [resolvable:$true] %s847
      %s849 = sshll.u32 %s10, 4
      %s850 = int_to_ptr.hbm [resolvable:$true] %s849
      %852 = dma.vmem_to_hbm [thread:$0]  %s848, 128, %s850, [#allocation4]
    $region73: #{tpu_custom_call.1} parent=1 // pred_fallthru
      _
    // Predicated region
    $region74: #{tpu_custom_call.1} parent=1 // pred_check
      _
    $region75: #{tpu_custom_call.1} parent=1 // pred_check_branch
      %854 = sbr.rel (0) target = $region77
    $region76: #{tpu_custom_call.1} parent=1 // pred_region
      %856 = dma.done [#allocation4], 128
    $region77: #{tpu_custom_call.1} parent=1 // pred_fallthru
      _
    %857 = vsyncpa [#allocation3], 1
    %858 = vsyncpa [#allocation6], 1
    %859 = vsyncpa [#allocation9], 1
    %860 = vsyncpa [#allocation12], 1
    %861 = vsyncpa [#allocation4], 1

</llo_original>
